<compile_context>
chip_gen: v5e
topology: v5e:2x2
jax: 0.10.0
libtpu: 0.0.40
codegen_flags: <defaults>
</compile_context>

<pallas_src>
import jax
import jax.numpy as jnp
from jax.experimental import pallas as pl
from jax.experimental.pallas import tpu as pltpu


def _round_up(n, m):
    return ((n + m - 1) // m) * m


def _vmem_capacity_bytes():
    """Physical per-core VMEM capacity, with a conservative fallback."""
    try:
        return int(pltpu.get_tpu_info().vmem_capacity_bytes)
    except Exception:
        return 64 << 20  # v7x-sized physical VMEM: safe on every generation


def _mlp_kernel(x_ref, w1_ref, b1_ref, w2_ref, b2_ref, o_ref):
    # Cast x to bf16 in-register (free in a mem-bound kernel); both matmuls
    # run bf16 operands on the MXU with f32 accumulation.  Bias add / ReLU
    # epilogue stays f32 (VPU-safe on v5e, which has no bf16 VPU path).
    x = x_ref[...].astype(jnp.bfloat16)
    h = jnp.dot(x, w1_ref[...], preferred_element_type=jnp.float32)
    h = jnp.maximum(h + b1_ref[...], 0.0)                  # b1 [1, Hp] broadcasts
    y = jnp.dot(h.astype(w2_ref.dtype), w2_ref[...],
                preferred_element_type=jnp.float32)
    o_ref[...] = (y + b2_ref[...]).astype(o_ref.dtype)     # unpadded (block_b, C) store


def prepare_params(w1, b1, w2, b2):
    """One-time parameter prep (hoisted out of the per-call forward path).

    Weights are stored [in, out] so the kernel computes x @ W + b (== torch
    Linear's x @ W.T + b with W [out, in]).  Only the hidden dim is
    zero-padded (to a lane multiple of 128); padding is exact because padded
    h columns are ReLU(0 + 0) = 0 and the matching w2 rows are 0.  D and C
    are left unpadded.
    """
    D, H = w1.shape
    C = w2.shape[1]
    Hp = _round_up(H, 128)
    w1p = jnp.zeros((D, Hp), jnp.bfloat16).at[:, :H].set(w1.astype(jnp.bfloat16))
    b1p = jnp.zeros((1, Hp), jnp.float32).at[:, :H].set(
        b1.reshape(1, H).astype(jnp.float32))
    w2p = jnp.zeros((Hp, C), jnp.bfloat16).at[:H, :].set(w2.astype(jnp.bfloat16))
    b2p = b2.reshape(1, C).astype(jnp.float32)
    return w1p, b1p, w2p, b2p


def mlp_forward(x, params, *, block_b=None):
    """x: [B, D] (any float dtype); params from prepare_params().

    Returns f32 logits [B, C].
    """
    w1p, b1p, w2p, b2p = params
    B, D = x.shape
    Hp = w1p.shape[1]
    C = w2p.shape[1]

    x_bytes = jnp.dtype(x.dtype).itemsize

    # --- VMEM accounting.  Weights keep a constant block index (resident),
    # but Pallas still allocates 2x buffers for them by default -> count them
    # twice.  x / out tiles are double-buffered; h lives once in f32 plus a
    # bf16 copy; x gets an in-kernel bf16 copy.
    weight_bytes = w1p.size * 2 + w2p.size * 2 + (Hp + C) * 4
    per_row_bytes = 2 * D * x_bytes + 2 * C * 4 + Hp * 4 + Hp * 2 + D * 2

    cap = _vmem_capacity_bytes()
    budget = cap // 2  # leave half of physical VMEM as compiler headroom

    if block_b is None:
        avail = max(budget - 2 * weight_bytes, 16 * per_row_bytes)
        block_b = min(1024, avail // per_row_bytes)
        # Keep >= ~4 grid steps so the "parallel" axis shards across both
        # v7x TensorCores (and the pipeline has work to overlap).
        block_b = min(block_b, max(16, _round_up(pl.cdiv(B, 4), 16)))
    block_b = max(16, min(int(block_b), _round_up(B, 16)))
    block_b = (block_b // 16) * 16          # bf16 sublane packing (16 rows/vreg)

    steps = pl.cdiv(B, block_b)
    Bp = steps * block_b
    xp = x if Bp == B else jnp.zeros((Bp, D), x.dtype).at[:B].set(x)

    vmem_need = 2 * weight_bytes + block_b * per_row_bytes
    vmem_limit = int(min(cap, max(2 * vmem_need, 8 << 20)))

    out = pl.pallas_call(
        _mlp_kernel,
        out_shape=jax.ShapeDtypeStruct((Bp, C), jnp.float32),
        grid=(steps,),
        in_specs=[
            pl.BlockSpec((block_b, D), lambda i: (i, 0)),   # x tile moves per step
            pl.BlockSpec((D, Hp), lambda i: (0, 0)),        # weights stay resident
            pl.BlockSpec((1, Hp), lambda i: (0, 0)),
            pl.BlockSpec((Hp, C), lambda i: (0, 0)),
            pl.BlockSpec((1, C), lambda i: (0, 0)),
        ],
        out_specs=pl.BlockSpec((block_b, C), lambda i: (i, 0)),
        compiler_params=pltpu.CompilerParams(
            dimension_semantics=("parallel",),              # megacore sharding
            vmem_limit_bytes=vmem_limit),
    )(xp, w1p, b1p, w2p, b2p)

    return out if Bp == B else out[:B]


def reference_forward_bf16(x, w1, b1, w2, b2):
    """Reference matching the kernel's bf16-operand / f32-accumulate math."""
    xb = x.astype(jnp.bfloat16)
    w1b = w1.astype(jnp.bfloat16)
    w2b = w2.astype(jnp.bfloat16)
    h = jnp.maximum(
        jnp.dot(xb, w1b, preferred_element_type=jnp.float32) + b1, 0.0)
    return jnp.dot(h.astype(jnp.bfloat16), w2b,
                   preferred_element_type=jnp.float32) + b2


def reference_forward_f32(x, w1, b1, w2, b2):
    h = jnp.maximum(x @ w1 + b1, 0.0)
    return h @ w2 + b2


if __name__ == "__main__":
    # Small shapes consistent with an HW1P2-style frame classifier.
    # B=256 with block_b=64 gives a 4-step grid so batch tiling / pipelining
    # (and megacore sharding on v7x) is actually exercised.
    B, D, H, C = 256, 32, 64, 16

    key = jax.random.PRNGKey(0)
    kx, kw1, kb1, kw2, kb2 = jax.random.split(key, 5)

    x = jax.random.normal(kx, (B, D), dtype=jnp.float32)
    # Deterministic param init (Kaiming-ish scale), stored as [in, out].
    w1 = jax.random.normal(kw1, (D, H), dtype=jnp.float32) * (1.0 / jnp.sqrt(D))
    b1 = jax.random.normal(kb1, (1, H), dtype=jnp.float32) * 0.01
    w2 = jax.random.normal(kw2, (H, C), dtype=jnp.float32) * (1.0 / jnp.sqrt(H))
    b2 = jax.random.normal(kb2, (1, C), dtype=jnp.float32) * 0.01

    params = prepare_params(w1, b1, w2, b2)   # one-time prep, not per-forward
    out = mlp_forward(x, params, block_b=64)
    out = jax.block_until_ready(out)

    assert out.shape == (B, C), out.shape

    ref_bf16 = reference_forward_bf16(x, w1, b1, w2, b2)
    assert jnp.allclose(out, ref_bf16, atol=1e-3, rtol=1e-3), \
        "mismatch vs bf16-operand JAX reference"

    ref_f32 = reference_forward_f32(x, w1, b1, w2, b2)
    assert jnp.allclose(out, ref_f32, atol=5e-2, rtol=5e-2), \
        "mismatch vs f32 JAX reference (beyond bf16 tolerance)"

    print("KERNEL_OK")
</pallas_src>

<mosaic_0001>
module attributes {stable_mosaic.version = 11 : i64} {
  func.func @_mlp_kernel(%arg0: i32, %arg1: memref<64x32xf32, #tpu.memory_space<vmem>>, %arg2: memref<32x128xbf16, #tpu.memory_space<vmem>>, %arg3: memref<1x128xf32, #tpu.memory_space<vmem>>, %arg4: memref<128x16xbf16, #tpu.memory_space<vmem>>, %arg5: memref<1x16xf32, #tpu.memory_space<vmem>>, %arg6: memref<64x16xf32, #tpu.memory_space<vmem>>) attributes {dimension_semantics = [#tpu.dimension_semantics<parallel>], iteration_bounds = array<i64: 4>, scalar_prefetch = 0 : i64, scratch_operands = 0 : i64, tpu.core_type = #tpu.core_type<tc>, window_params = [{transform_indices = @transform_0, window_bounds = array<i64: 64, 32>}, {pipeline_mode = #tpu.pipeline_mode<synchronous>, transform_indices = @transform_1, window_bounds = array<i64: 32, 128>}, {pipeline_mode = #tpu.pipeline_mode<synchronous>, transform_indices = @transform_2, window_bounds = array<i64: 1, 128>}, {pipeline_mode = #tpu.pipeline_mode<synchronous>, transform_indices = @transform_3, window_bounds = array<i64: 128, 16>}, {pipeline_mode = #tpu.pipeline_mode<synchronous>, transform_indices = @transform_4, window_bounds = array<i64: 1, 16>}, {transform_indices = @transform_5, window_bounds = array<i64: 64, 16>}]} {
    %c0 = arith.constant 0 : index
    %c0_0 = arith.constant 0 : index
    %0 = vector.load %arg1[%c0, %c0_0] : memref<64x32xf32, #tpu.memory_space<vmem>>, vector<64x32xf32>
    %1 = arith.truncf %0 : vector<64x32xf32> to vector<64x32xbf16>
    %c0_1 = arith.constant 0 : index
    %c0_2 = arith.constant 0 : index
    %2 = vector.load %arg2[%c0_1, %c0_2] : memref<32x128xbf16, #tpu.memory_space<vmem>>, vector<32x128xbf16>
    %cst = arith.constant dense<0.000000e+00> : vector<64x128xf32>
    %3 = tpu.matmul %1, %2, %cst {dimension_numbers = #tpu.dot_dimension_numbers<[1], [0], [0], [1], [0, 0, 1, 1], [], []>} : vector<64x32xbf16>, vector<32x128xbf16>, vector<64x128xf32> -> vector<64x128xf32>
    %c0_3 = arith.constant 0 : index
    %c0_4 = arith.constant 0 : index
    %4 = vector.load %arg3[%c0_3, %c0_4] : memref<1x128xf32, #tpu.memory_space<vmem>>, vector<1x128xf32>
    %5 = vector.broadcast %4 : vector<1x128xf32> to vector<64x128xf32>
    %6 = arith.addf %3, %5 : vector<64x128xf32>
    %cst_5 = arith.constant 0.000000e+00 : f32
    %7 = vector.broadcast %cst_5 : f32 to vector<64x128xf32>
    %8 = arith.maximumf %6, %7 : vector<64x128xf32>
    %9 = arith.truncf %8 : vector<64x128xf32> to vector<64x128xbf16>
    %c0_6 = arith.constant 0 : index
    %c0_7 = arith.constant 0 : index
    %10 = vector.load %arg4[%c0_6, %c0_7] : memref<128x16xbf16, #tpu.memory_space<vmem>>, vector<128x16xbf16>
    %cst_8 = arith.constant dense<0.000000e+00> : vector<64x16xf32>
    %11 = tpu.matmul %9, %10, %cst_8 {dimension_numbers = #tpu.dot_dimension_numbers<[1], [0], [0], [1], [0, 0, 1, 1], [], []>} : vector<64x128xbf16>, vector<128x16xbf16>, vector<64x16xf32> -> vector<64x16xf32>
    %c0_9 = arith.constant 0 : index
    %c0_10 = arith.constant 0 : index
    %12 = vector.load %arg5[%c0_9, %c0_10] : memref<1x16xf32, #tpu.memory_space<vmem>>, vector<1x16xf32>
    %13 = vector.broadcast %12 : vector<1x16xf32> to vector<64x16xf32>
    %14 = arith.addf %11, %13 : vector<64x16xf32>
    %c0_11 = arith.constant 0 : index
    %c0_12 = arith.constant 0 : index
    %15 = vector.load %arg6[%c0_11, %c0_12] : memref<64x16xf32, #tpu.memory_space<vmem>>, vector<64x16xf32>
    tpu.vector_store %arg6[%c0_11, %c0_12], %14 {strides = array<i32>} : memref<64x16xf32, #tpu.memory_space<vmem>>, vector<64x16xf32>,
    return
  }
  func.func @transform_0(%arg0: i32) -> (i32, i32) {
    %c0_i32 = arith.constant 0 : i32
    %c0_i32_0 = arith.constant 0 : i32
    return %arg0, %c0_i32 : i32, i32
  }
  func.func @transform_1(%arg0: i32) -> (i32, i32) {
    %c0_i32 = arith.constant 0 : i32
    %c0_i32_0 = arith.constant 0 : i32
    %c0_i32_1 = arith.constant 0 : i32
    return %c0_i32, %c0_i32_0 : i32, i32
  }
  func.func @transform_2(%arg0: i32) -> (i32, i32) {
    %c0_i32 = arith.constant 0 : i32
    %c0_i32_0 = arith.constant 0 : i32
    %c0_i32_1 = arith.constant 0 : i32
    return %c0_i32, %c0_i32_0 : i32, i32
  }
  func.func @transform_3(%arg0: i32) -> (i32, i32) {
    %c0_i32 = arith.constant 0 : i32
    %c0_i32_0 = arith.constant 0 : i32
    %c0_i32_1 = arith.constant 0 : i32
    return %c0_i32, %c0_i32_0 : i32, i32
  }
  func.func @transform_4(%arg0: i32) -> (i32, i32) {
    %c0_i32 = arith.constant 0 : i32
    %c0_i32_0 = arith.constant 0 : i32
    %c0_i32_1 = arith.constant 0 : i32
    return %c0_i32, %c0_i32_0 : i32, i32
  }
  func.func @transform_5(%arg0: i32) -> (i32, i32) {
    %c0_i32 = arith.constant 0 : i32
    %c0_i32_0 = arith.constant 0 : i32
    return %arg0, %c0_i32 : i32, i32
  }
}

</mosaic_0001>

<llo_original>
// kernel: tpu_custom_call.1
$region0: #{tpu_custom_call.1}
  #allocation0 [shape = 'u32[]', space=smem, size = 0x4, offset = 0x4, fixed_abs, tag = 'smem constant byte address 0x4 - core index']
  #allocation1 [shape = 'u32[72,128]{1,0:T(1,128)}', space=vmem, size = 0x9000, scoped, tag = 'internal scratch']
  %s0 = inlined_call_operand.vmem [shape: f32[256,32], index: 0, kind: input, shape index: {}]
  %s1 = inlined_call_operand.vmem [shape: bf16[32,128], index: 1, kind: input, shape index: {}]
  %s2 = inlined_call_operand.vmem [shape: f32[1,128], index: 2, kind: input, shape index: {}]
  %s3 = inlined_call_operand.vmem [shape: bf16[128,16], index: 3, kind: input, shape index: {}]
  %s4 = inlined_call_operand.vmem [shape: f32[1,16], index: 4, kind: input, shape index: {}]
  %s5 = inlined_call_operand.vmem [shape: f32[256,16], index: 5, kind: output, shape index: {}]
  %s6 = sld [smem:[#allocation0]]
  $region53: #{tpu_custom_call.1} parent=0
    _
  %s8 = ssub.s32 1, %s6
  %s9 = scalar_select 0, %s8, %s6
  loop: start=0, step=1, limit=6
  $region2: #{tpu_custom_call.1} parent=0 // loop_pre_header
    _
  $region3: #{tpu_custom_call.1} parent=0 // loop_header
    %s11 = sphi 0, %s15
    %p12 = scmp.ge.s32.totalorder %s11, 6
    %s21 = sphi 0, %s23
    %s24 = sphi 0, %s21
    %s25 = sphi 0, %s24
    %s41 = sphi 0, %s25
    %s45 = sphi 0, %s45
    %s47 = sphi 0, %s45
    %s48 = sphi 0, %s47
    %s62 = sphi 0, %s48
    %s66 = sphi 0, %s66
    %s68 = sphi 0, %s66
    %s69 = sphi 0, %s68
    %s83 = sphi 0, %s69
    %s87 = sphi 0, %s87
    %s89 = sphi 0, %s87
    %s90 = sphi 0, %s89
    %s104 = sphi 0, %s90
    %s108 = sphi 0, %s108
    %s110 = sphi 0, %s108
    %s111 = sphi 0, %s110
    %s125 = sphi 0, %s111
    %s131 = sphi 0, %s133
    %s134 = sphi 0, %s131
    %s135 = sphi 0, %s134
    %s151 = sphi 0, %s135
  $region4: #{tpu_custom_call.1} parent=0 // loop_header_branch
    %14 = sbr.rel (%p12) target = $region8
  $region5: #{tpu_custom_call.1} parent=0 // loop_body
    %s16 = ssub.s32 %s11, 1
    %s17 = ssub.s32 %s11, 2
    %s18 = sadd.s32 %s11, 1
    %s19 = ssub.s32 %s11, %s18
    %p20 = scmp.eq.s32.totalorder %s19, 0
    %s22 = sadd.s32 %s21, 1
    %s23 = scalar_select %p20, %s21, %s22
    %p26 = pneg %p20
    %p27 = scmp.eq.s32.totalorder %s11, 3
    %p28 = por %p26, %p27
    %p29 = scmp.ne.s32.totalorder %s21, %s24
    %p30 = scmp.eq.s32.totalorder %s11, 0
    %p31 = por %p29, %p30
    %p32 = scmp.ne.s32.totalorder %s21, %s24
    %p33 = scmp.eq.s32.totalorder %s16, 3
    %p34 = por %p32, %p33
    %p35 = scmp.ne.s32.totalorder %s24, %s25
    %p36 = scmp.eq.s32.totalorder %s16, 0
    %p37 = por %p35, %p36
    %p38 = scmp.ne.s32.totalorder %s24, %s25
    %p39 = scmp.eq.s32.totalorder %s17, 3
    %p40 = por %p38, %p39
    %p42 = scmp.ne.s32.totalorder %s25, %s41
    %p43 = scmp.eq.s32.totalorder %s17, 0
    %p44 = por %p42, %p43
    %s46 = sadd.s32 %s45, 1
    %p49 = scmp.eq.s32.totalorder %s11, 3
    %p50 = scmp.ne.s32.totalorder %s45, %s47
    %p51 = scmp.eq.s32.totalorder %s11, 0
    %p52 = por %p50, %p51
    %p53 = scmp.ne.s32.totalorder %s45, %s47
    %p54 = scmp.eq.s32.totalorder %s16, 3
    %p55 = por %p53, %p54
    %p56 = scmp.ne.s32.totalorder %s47, %s48
    %p57 = scmp.eq.s32.totalorder %s16, 0
    %p58 = por %p56, %p57
    %p59 = scmp.ne.s32.totalorder %s47, %s48
    %p60 = scmp.eq.s32.totalorder %s17, 3
    %p61 = por %p59, %p60
    %p63 = scmp.ne.s32.totalorder %s48, %s62
    %p64 = scmp.eq.s32.totalorder %s17, 0
    %p65 = por %p63, %p64
    %s67 = sadd.s32 %s66, 1
    %p70 = scmp.eq.s32.totalorder %s11, 3
    %p71 = scmp.ne.s32.totalorder %s66, %s68
    %p72 = scmp.eq.s32.totalorder %s11, 0
    %p73 = por %p71, %p72
    %p74 = scmp.ne.s32.totalorder %s66, %s68
    %p75 = scmp.eq.s32.totalorder %s16, 3
    %p76 = por %p74, %p75
    %p77 = scmp.ne.s32.totalorder %s68, %s69
    %p78 = scmp.eq.s32.totalorder %s16, 0
    %p79 = por %p77, %p78
    %p80 = scmp.ne.s32.totalorder %s68, %s69
    %p81 = scmp.eq.s32.totalorder %s17, 3
    %p82 = por %p80, %p81
    %p84 = scmp.ne.s32.totalorder %s69, %s83
    %p85 = scmp.eq.s32.totalorder %s17, 0
    %p86 = por %p84, %p85
    %s88 = sadd.s32 %s87, 1
    %p91 = scmp.eq.s32.totalorder %s11, 3
    %p92 = scmp.ne.s32.totalorder %s87, %s89
    %p93 = scmp.eq.s32.totalorder %s11, 0
    %p94 = por %p92, %p93
    %p95 = scmp.ne.s32.totalorder %s87, %s89
    %p96 = scmp.eq.s32.totalorder %s16, 3
    %p97 = por %p95, %p96
    %p98 = scmp.ne.s32.totalorder %s89, %s90
    %p99 = scmp.eq.s32.totalorder %s16, 0
    %p100 = por %p98, %p99
    %p101 = scmp.ne.s32.totalorder %s89, %s90
    %p102 = scmp.eq.s32.totalorder %s17, 3
    %p103 = por %p101, %p102
    %p105 = scmp.ne.s32.totalorder %s90, %s104
    %p106 = scmp.eq.s32.totalorder %s17, 0
    %p107 = por %p105, %p106
    %s109 = sadd.s32 %s108, 1
    %p112 = scmp.eq.s32.totalorder %s11, 3
    %p113 = scmp.ne.s32.totalorder %s108, %s110
    %p114 = scmp.eq.s32.totalorder %s11, 0
    %p115 = por %p113, %p114
    %p116 = scmp.ne.s32.totalorder %s108, %s110
    %p117 = scmp.eq.s32.totalorder %s16, 3
    %p118 = por %p116, %p117
    %p119 = scmp.ne.s32.totalorder %s110, %s111
    %p120 = scmp.eq.s32.totalorder %s16, 0
    %p121 = por %p119, %p120
    %p122 = scmp.ne.s32.totalorder %s110, %s111
    %p123 = scmp.eq.s32.totalorder %s17, 3
    %p124 = por %p122, %p123
    %p126 = scmp.ne.s32.totalorder %s111, %s125
    %p127 = scmp.eq.s32.totalorder %s17, 0
    %p128 = por %p126, %p127
    %s129 = ssub.s32 %s11, %s18
    %p130 = scmp.eq.s32.totalorder %s129, 0
    %s132 = sadd.s32 %s131, 1
    %s133 = scalar_select %p130, %s131, %s132
    %p136 = pneg %p130
    %p137 = scmp.eq.s32.totalorder %s11, 3
    %p138 = por %p136, %p137
    %p139 = scmp.ne.s32.totalorder %s131, %s134
    %p140 = scmp.eq.s32.totalorder %s11, 0
    %p141 = por %p139, %p140
    %p142 = scmp.ne.s32.totalorder %s131, %s134
    %p143 = scmp.eq.s32.totalorder %s16, 3
    %p144 = por %p142, %p143
    %p145 = scmp.ne.s32.totalorder %s134, %s135
    %p146 = scmp.eq.s32.totalorder %s16, 0
    %p147 = por %p145, %p146
    %p148 = scmp.ne.s32.totalorder %s134, %s135
    %p149 = scmp.eq.s32.totalorder %s17, 3
    %p150 = por %p148, %p149
    %p152 = scmp.ne.s32.totalorder %s135, %s151
    %p153 = scmp.eq.s32.totalorder %s17, 0
    %p154 = por %p152, %p153
    %p155 = scmp.le.s32.totalorder 1, %s11
    %p156 = scmp.lt.s32.totalorder %s11, 5
    %p157 = pnand %p155, %p156
    %p158 = pneg %p157
    // Predicated region
    $region9: #{tpu_custom_call.1} parent=5 // pred_check
      _
    $region10: #{tpu_custom_call.1} parent=5 // pred_check_branch
      %160 = sbr.rel (%p157) target = $region12
    $region11: #{tpu_custom_call.1} parent=5 // pred_region
      %s161 = ssub.s32 %s11, 1
      // Predicated region
      $region13: #{tpu_custom_call.1} parent=11 // pred_check
        %p162 = pneg %p58
      $region14: #{tpu_custom_call.1} parent=11 // pred_check_branch
        %164 = sbr.rel (%p162) target = $region16
      $region15: #{tpu_custom_call.1} parent=11 // pred_region
        _
      $region16: #{tpu_custom_call.1} parent=11 // pred_fallthru
        _
      // Predicated region
      $region17: #{tpu_custom_call.1} parent=11 // pred_check
        %p165 = pneg %p79
      $region18: #{tpu_custom_call.1} parent=11 // pred_check_branch
        %167 = sbr.rel (%p165) target = $region20
      $region19: #{tpu_custom_call.1} parent=11 // pred_region
        _
      $region20: #{tpu_custom_call.1} parent=11 // pred_fallthru
        _
      // Predicated region
      $region21: #{tpu_custom_call.1} parent=11 // pred_check
        %p168 = pneg %p100
      $region22: #{tpu_custom_call.1} parent=11 // pred_check_branch
        %170 = sbr.rel (%p168) target = $region24
      $region23: #{tpu_custom_call.1} parent=11 // pred_region
        _
      $region24: #{tpu_custom_call.1} parent=11 // pred_fallthru
        _
      // Predicated region
      $region25: #{tpu_custom_call.1} parent=11 // pred_check
        %p171 = pneg %p121
      $region26: #{tpu_custom_call.1} parent=11 // pred_check_branch
        %173 = sbr.rel (%p171) target = $region28
      $region27: #{tpu_custom_call.1} parent=11 // pred_region
        _
      $region28: #{tpu_custom_call.1} parent=11 // pred_fallthru
        _
    $region12: #{tpu_custom_call.1} parent=5 // pred_fallthru
      _
    %p174 = scmp.lt.s32.totalorder %s11, 4
    // Predicated region
    $region29: #{tpu_custom_call.1} parent=5 // pred_check
      %p175 = pneg %p174
    $region30: #{tpu_custom_call.1} parent=5 // pred_check_branch
      %177 = sbr.rel (%p175) target = $region32
    $region31: #{tpu_custom_call.1} parent=5 // pred_region
      // Predicated region
      $region33: #{tpu_custom_call.1} parent=31 // pred_check
        %p178 = pneg %p31
      $region34: #{tpu_custom_call.1} parent=31 // pred_check_branch
        %180 = sbr.rel (%p178) target = $region36
      $region35: #{tpu_custom_call.1} parent=31 // pred_region
        %s181 = smul.u32 8, %s11
        %p182 = scmp.lt.s32.totalorder %s181, 31
        %s183 = scalar_select %p182, %s181, 31
        %s184 = smul.addr %s183, 8
        %s185 = scalar_lea.vmem %s0, %s184
        %s186 = smul.u32 8, %s11
      $region36: #{tpu_custom_call.1} parent=31 // pred_fallthru
        _
    $region32: #{tpu_custom_call.1} parent=5 // pred_fallthru
      _
    %p187 = scmp.le.s32.totalorder 1, %s11
    %p188 = scmp.lt.s32.totalorder %s11, 5
    %p189 = pnand %p187, %p188
    %p190 = pneg %p189
    // Predicated region
    $region37: #{tpu_custom_call.1} parent=5 // pred_check
      _
    $region38: #{tpu_custom_call.1} parent=5 // pred_check_branch
      %192 = sbr.rel (%p189) target = $region40
    $region39: #{tpu_custom_call.1} parent=5 // pred_region
      %s193 = ssub.s32 %s11, 1
      %s194 = smul.u32 8, %s16
      %p195 = scmp.lt.s32.totalorder %s194, 31
      %s196 = scalar_select %p195, %s194, 31
      %s197 = smul.addr %s196, 8
      %s198 = scalar_lea.vmem %s0, %s197
      %p199 = pneg %p37
      %p200 = pneg %p34
      %p201 = pneg %p58
      %p202 = pneg %p55
      %p203 = pneg %p79
      %p204 = pneg %p76
      %p205 = pneg %p100
      %p206 = pneg %p97
      %p207 = pneg %p121
      %p208 = pneg %p118
      %p209 = pneg %p147
      %p210 = pneg %p144
      %s211 = smul.u32 8, %s16
      %p212 = scmp.lt.s32.totalorder %s211, 31
      %s213 = scalar_select %p212, %s211, 31
      %s214 = smul.addr %s213, 8
      %s215 = scalar_lea.vmem %s5, %s214
      %s216 = smul.u32 8, %s16
      %p217 = scmp.lt.s32.totalorder %s216, 31
      %s218 = scalar_select %p217, %s216, 31
      %s219 = smul.addr %s218, 8
      %s220 = scalar_lea.vmem %s0, %s219
      %s221 = smul.u32 8, %s16
      %s222 = smul.u32 8, %s16
      %p223 = scmp.lt.s32.totalorder %s222, 31
      %s224 = scalar_select %p223, %s222, 31
      %s225 = smul.addr %s224, 8
      %s226 = scalar_lea.vmem %s5, %s225
      %s227 = smul.u32 8, %s16
      %v229 = vld [vmem:[%s220] sm:$0xff]
      %v230 = vld [vmem:[%s220 + $0x8] sm:$0xff]
      %v231 = vld [vmem:[%s220 + $0x10] sm:$0xff]
      %v232 = vld [vmem:[%s220 + $0x18] sm:$0xff]
      %v233 = vld [vmem:[%s220 + $0x20] sm:$0xff]
      %v234 = vld [vmem:[%s220 + $0x28] sm:$0xff]
      %v235 = vld [vmem:[%s220 + $0x30] sm:$0xff]
      %v236 = vld [vmem:[%s220 + $0x38] sm:$0xff]
      %v237 = vpack.c.bf16 %v230, %v229
      %v238 = vpack.c.bf16 %v232, %v231
      %v239 = vpack.c.bf16 %v234, %v233
      %v240 = vpack.c.bf16 %v236, %v235
      %v241 = vld [vmem:[%s1] sm:$0xf]
      %v242 = vld [vmem:[%s1 + $0x4] sm:$0xf]
      %v243 = vld [vmem:[%s1 + $0x8] sm:$0xf]
      %v244 = vld [vmem:[%s1 + $0xc] sm:$0xf]
      %v245 = vld [vmem:[%s2] sm:$0x1]
      %v247 = vperm.slane %v245, 0
      %v253 = vunpack.c.l.b16 %v241
      %v254 = vunpack.c.l.b16 %v242
      %v255 = vunpack.c.l.b16 %v243
      %v256 = vunpack.c.l.b16 %v244
      %v257 = vpack.c.b16 %v254, %v253
      %v258 = vpack.c.b16 %v256, %v255
      %vm261 = vcmask 261120
      %v263 = vsel %vm261, %v237, 0
      %v266 = vsel %vm261, %v238, 0
      %v269 = vsel %vm261, %v239, 0
      %v272 = vsel %vm261, %v240, 0
      %274 = vmatpush.bf16.msra.mxu0 0
      %275 = vmatpush.bf16.msra.mxu0 0
      %276 = vmatpush.bf16.msra.mxu0 0
      %277 = vmatpush.bf16.msra.mxu0 0
      %278 = vmatpush.bf16.msra.mxu0 0
      %279 = vmatpush.bf16.msra.mxu0 0
      %280 = vmatpush.bf16.msra.mxu0 %v258
      %281 = vmatpush.bf16.msra.mxu0 %v257
      %282 = vmatmul.bf16.gmra.mxu0 %v263
      %v283 = vpop.f32.mrf.mxu0
      %v284 = vadd.f32 %v247, %v283
      %v285 = vpop.f32.mrf.mxu0
      %v286 = vadd.f32 %v247, %v285
      %287 = vmatmul.bf16.gmra.mxu0 %v266
      %v288 = vpop.f32.mrf.mxu0
      %v289 = vadd.f32 %v247, %v288
      %v290 = vpop.f32.mrf.mxu0
      %v291 = vadd.f32 %v247, %v290
      %292 = vmatmul.bf16.gmra.mxu0 %v269
      %v293 = vpop.f32.mrf.mxu0
      %v294 = vadd.f32 %v247, %v293
      %v295 = vpop.f32.mrf.mxu0
      %v296 = vadd.f32 %v247, %v295
      %297 = vmatmul.bf16.gmra.mxu0 %v272
      %v298 = vpop.f32.mrf.mxu0
      %v299 = vadd.f32 %v247, %v298
      %v300 = vpop.f32.mrf.mxu0
      %v301 = vadd.f32 %v247, %v300
      %302 = vdwg.mxu0
      %v303 = vmax.f32 %v284, 0.0
      %v304 = vmax.f32 %v286, 0.0
      %v305 = vmax.f32 %v289, 0.0
      %v306 = vmax.f32 %v291, 0.0
      %v307 = vmax.f32 %v294, 0.0
      %v308 = vmax.f32 %v296, 0.0
      %v309 = vmax.f32 %v299, 0.0
      %v310 = vmax.f32 %v301, 0.0
      %v311 = vpack.c.bf16 %v304, %v303
      %v312 = vpack.c.bf16 %v306, %v305
      %v313 = vpack.c.bf16 %v308, %v307
      %v314 = vpack.c.bf16 %v310, %v309
      %v315 = vld [vmem:[%s3] sm:$0xf]
      %v316 = vld [vmem:[%s3 + $0x4] sm:$0xf]
      %v317 = vld [vmem:[%s3 + $0x8] sm:$0xf]
      %v318 = vld [vmem:[%s3 + $0xc] sm:$0xf]
      %v319 = vld [vmem:[%s3 + $0x10] sm:$0xf]
      %v320 = vld [vmem:[%s3 + $0x14] sm:$0xf]
      %v321 = vld [vmem:[%s3 + $0x18] sm:$0xf]
      %v322 = vld [vmem:[%s3 + $0x1c] sm:$0xf]
      %v323 = vld [vmem:[%s3 + $0x20] sm:$0xf]
      %v324 = vld [vmem:[%s3 + $0x24] sm:$0xf]
      %v325 = vld [vmem:[%s3 + $0x28] sm:$0xf]
      %v326 = vld [vmem:[%s3 + $0x2c] sm:$0xf]
      %v327 = vld [vmem:[%s3 + $0x30] sm:$0xf]
      %v328 = vld [vmem:[%s3 + $0x34] sm:$0xf]
      %v329 = vld [vmem:[%s3 + $0x38] sm:$0xf]
      %v330 = vld [vmem:[%s3 + $0x3c] sm:$0xf]
      %v331 = vld [vmem:[%s4] sm:$0x1]
      %v333 = vperm.slane %v331, 0
      %v351 = vunpack.c.l.b16 %v315
      %v352 = vunpack.c.l.b16 %v316
      %v353 = vunpack.c.l.b16 %v317
      %v354 = vunpack.c.l.b16 %v318
      %v355 = vunpack.c.l.b16 %v319
      %v356 = vunpack.c.l.b16 %v320
      %v357 = vunpack.c.l.b16 %v321
      %v358 = vunpack.c.l.b16 %v322
      %v359 = vunpack.c.l.b16 %v323
      %v360 = vunpack.c.l.b16 %v324
      %v361 = vunpack.c.l.b16 %v325
      %v362 = vunpack.c.l.b16 %v326
      %v363 = vunpack.c.l.b16 %v327
      %v364 = vunpack.c.l.b16 %v328
      %v365 = vunpack.c.l.b16 %v329
      %v366 = vunpack.c.l.b16 %v330
      %v367 = vpack.c.b16 %v352, %v351
      %v368 = vpack.c.b16 %v354, %v353
      %v369 = vpack.c.b16 %v356, %v355
      %v370 = vpack.c.b16 %v358, %v357
      %v371 = vpack.c.b16 %v360, %v359
      %v372 = vpack.c.b16 %v362, %v361
      %v373 = vpack.c.b16 %v364, %v363
      %v374 = vpack.c.b16 %v366, %v365
      %383 = vmatpush.bf16.msra.mxu0 %v374
      %384 = vmatpush.bf16.msra.mxu0 %v373
      %385 = vmatpush.bf16.msra.mxu0 %v372
      %386 = vmatpush.bf16.msra.mxu0 %v371
      %387 = vmatpush.bf16.msra.mxu0 %v370
      %388 = vmatpush.bf16.msra.mxu0 %v369
      %389 = vmatpush.bf16.msra.mxu0 %v368
      %390 = vmatpush.bf16.msra.mxu0 %v367
      %391 = vmatmul.bf16.gmra.mxu0 %v311
      %v392 = vpop.f32.mrf.mxu0
      %v393 = vadd.f32 %v333, %v392
      %v394 = vpop.f32.mrf.mxu0
      %v395 = vadd.f32 %v333, %v394
      %396 = vmatmul.bf16.gmra.mxu0 %v312
      %v397 = vpop.f32.mrf.mxu0
      %v398 = vadd.f32 %v333, %v397
      %v399 = vpop.f32.mrf.mxu0
      %v400 = vadd.f32 %v333, %v399
      %401 = vmatmul.bf16.gmra.mxu0 %v313
      %v402 = vpop.f32.mrf.mxu0
      %v403 = vadd.f32 %v333, %v402
      %v404 = vpop.f32.mrf.mxu0
      %v405 = vadd.f32 %v333, %v404
      %406 = vmatmul.bf16.gmra.mxu0 %v314
      %v407 = vpop.f32.mrf.mxu0
      %v408 = vadd.f32 %v333, %v407
      %v409 = vpop.f32.mrf.mxu0
      %v410 = vadd.f32 %v333, %v409
      %411 = vdwg.mxu0
      %vm412 = vcmask 130048
      %413 = vst.msk [vmem:[%s226] sm:$0xff] %vm412, %v393
      %414 = vst.msk [vmem:[%s226 + $0x8] sm:$0xff] %vm412, %v395
      %415 = vst.msk [vmem:[%s226 + $0x10] sm:$0xff] %vm412, %v398
      %416 = vst.msk [vmem:[%s226 + $0x18] sm:$0xff] %vm412, %v400
      %417 = vst.msk [vmem:[%s226 + $0x20] sm:$0xff] %vm412, %v403
      %418 = vst.msk [vmem:[%s226 + $0x28] sm:$0xff] %vm412, %v405
      %419 = vst.msk [vmem:[%s226 + $0x30] sm:$0xff] %vm412, %v408
      %420 = vst.msk [vmem:[%s226 + $0x38] sm:$0xff] %vm412, %v410
      %s421 = smul.u32 8, %s16
      %p422 = scmp.lt.s32.totalorder %s421, 31
      %s423 = scalar_select %p422, %s421, 31
      %s424 = smul.addr %s423, 8
      %s425 = scalar_lea.vmem %s5, %s424
      // Predicated region
      $region41: #{tpu_custom_call.1} parent=39 // pred_check
        %p426 = pneg %p144
      $region42: #{tpu_custom_call.1} parent=39 // pred_check_branch
        %428 = sbr.rel (%p426) target = $region44
      $region43: #{tpu_custom_call.1} parent=39 // pred_region
        %s429 = smul.u32 8, %s16
      $region44: #{tpu_custom_call.1} parent=39 // pred_fallthru
        _
    $region40: #{tpu_custom_call.1} parent=5 // pred_fallthru
      _
    %p430 = scmp.le.s32.totalorder 2, %s11
    // Predicated region
    $region45: #{tpu_custom_call.1} parent=5 // pred_check
      %p431 = pneg %p430
    $region46: #{tpu_custom_call.1} parent=5 // pred_check_branch
      %433 = sbr.rel (%p431) target = $region48
    $region47: #{tpu_custom_call.1} parent=5 // pred_region
      %s434 = ssub.s32 %s11, 2
      // Predicated region
      $region49: #{tpu_custom_call.1} parent=47 // pred_check
        %p435 = pneg %p150
      $region50: #{tpu_custom_call.1} parent=47 // pred_check_branch
        %437 = sbr.rel (%p435) target = $region52
      $region51: #{tpu_custom_call.1} parent=47 // pred_region
        %s438 = smul.u32 8, %s17
        %p439 = scmp.lt.s32.totalorder %s438, 31
        %s440 = scalar_select %p439, %s438, 31
        %s441 = smul.addr %s440, 8
        %s442 = scalar_lea.vmem %s5, %s441
      $region52: #{tpu_custom_call.1} parent=47 // pred_fallthru
        _
    $region48: #{tpu_custom_call.1} parent=5 // pred_fallthru
      _
  $region6: #{tpu_custom_call.1} parent=0 // loop_footer
    %s15 = sadd.s32 1, %s11
  $region7: #{tpu_custom_call.1} parent=0 // loop_footer_branch
    %10 = sbr.rel target = $region3
  $region8: #{tpu_custom_call.1} parent=0 // loop_exit
    _

</llo_original>
